<compile_context>
chip_gen: v6e
topology: v6e:2x2x1
jax: 0.10.0
libtpu: 0.0.40
codegen_flags: <defaults>
</compile_context>

<pallas_src>
import functools
import math

import jax
import jax.numpy as jnp
from jax.experimental import pallas as pl
from jax.experimental.pallas import tpu as pltpu


def _leaky_relu(x, negative_slope=0.01):
    # Matches torch.nn.functional.leaky_relu default slope.
    return jnp.where(x >= 0, x, negative_slope * x)


def _ann_kernel(x_ref, w1_ref, b1_ref, w2_ref, b2_ref, w3_ref, b3_ref, o_ref,
                *, add_sigmoid: bool, compute_dtype):
    # x_ref:  (in_dim, batch_tile)  -- batch on lanes (lane-dense everywhere)
    # w*_ref: native torch (out, in) layout; b*_ref: (out, 1) f32 columns
    x = x_ref[...]
    w1 = w1_ref[...]
    w2 = w2_ref[...]
    w3 = w3_ref[...]
    b1 = b1_ref[...]          # (hid, 1): broadcast over lanes is a cheap splat,
    b2 = b2_ref[...]          # no materialized (hid, batch_tile) temp.
    b3 = b3_ref[...]

    # input_layer + leaky_relu  (f32 accumulation)
    h = jnp.dot(w1, x, preferred_element_type=jnp.float32) + b1
    h = _leaky_relu(h)

    # hidden_layer applied 3x with shared weights
    for _ in range(3):
        h = jnp.dot(w2, h.astype(compute_dtype),
                    preferred_element_type=jnp.float32) + b2
        h = _leaky_relu(h)

    # output_layer
    out = jnp.dot(w3, h.astype(compute_dtype),
                  preferred_element_type=jnp.float32) + b3
    if add_sigmoid:
        out = jax.nn.sigmoid(out)

    o_ref[...] = out.astype(o_ref.dtype)


def _round_up(n, m):
    return ((n + m - 1) // m) * m


@functools.partial(
    jax.jit,
    static_argnames=("add_sigmoid", "batch_tile", "compute_dtype",
                     "out_dtype", "x_transposed"))
def ann_forward(x, params, *, add_sigmoid: bool, batch_tile=None,
                compute_dtype=jnp.float32, out_dtype=jnp.float32,
                x_transposed: bool = False):
    """ANN forward pass via a Pallas TPU kernel.

    x: (B, in_neuron) f32/bf16, or (in_neuron, B) if x_transposed=True.
    params: torch-layout dict: w1 (hid,in), b1 (hid,1), w2 (hid,hid),
            b2 (hid,1), w3 (out,hid), b3 (out,1).
    compute_dtype: jnp.float32 (exact torch parity) or jnp.bfloat16
        (halves the streamed-x HBM bytes; the cast fuses into the same
        transpose pass; accumulation stays f32).
    Returns (B, out_neuron) in out_dtype (default f32).
    """
    if x_transposed:
        in_dim, B = x.shape
    else:
        B, in_dim = x.shape
    hid = params["w2"].shape[0]
    out_dim = params["w3"].shape[0]

    # ---- batch tiling: large lane-dense tiles, even grid when free ---------
    TILE = 256                          # keep tiles multiples of 256 (MXU N)
    if batch_tile is None:
        batch_tile = 16384              # big tiles amortise per-step overhead
    batch_tile = max(TILE, (int(batch_tile) // TILE) * TILE)
    batch_tile = min(batch_tile, _round_up(B, TILE))
    grid_n = pl.cdiv(B, batch_tile)
    b_pad = grid_n * batch_tile
    # v7x megacore: prefer an even number of grid steps (two TensorCores share
    # the "parallel" axis) when that does not increase the padded batch.
    if grid_n % 2 == 1 and B > TILE:
        tile2 = max(TILE, _round_up(pl.cdiv(B, grid_n + 1), TILE))
        grid2 = pl.cdiv(B, tile2)
        if grid2 % 2 == 0 and grid2 * tile2 <= b_pad:
            batch_tile, grid_n, b_pad = tile2, grid2, grid2 * tile2

    # ---- x layout: (in_dim, b_pad) with batch on lanes ----------------------
    # Under jit the pad + transpose + cast fuse into one copy pass; with
    # x_transposed=True (caller already has (in_dim, B)) there is no pass at
    # all when B is tile-aligned.
    if x_transposed:
        x_t = x if b_pad == B else jnp.pad(x, ((0, 0), (0, b_pad - B)))
    else:
        x_t = x if b_pad == B else jnp.pad(x, ((0, b_pad - B), (0, 0)))
        x_t = x_t.T
    x_t = x_t.astype(compute_dtype)

    w1 = params["w1"].astype(compute_dtype)
    w2 = params["w2"].astype(compute_dtype)
    w3 = params["w3"].astype(compute_dtype)
    b1 = params["b1"].astype(jnp.float32)
    b2 = params["b2"].astype(jnp.float32)
    b3 = params["b3"].astype(jnp.float32)

    kernel = functools.partial(_ann_kernel, add_sigmoid=add_sigmoid,
                               compute_dtype=compute_dtype)

    # Params use a constant block index -> resident in VMEM across grid steps.
    const_spec = lambda shape: pl.BlockSpec(shape, lambda i: (0, 0))

    x_item = jnp.dtype(compute_dtype).itemsize
    o_item = jnp.dtype(out_dtype).itemsize
    flops = 2 * b_pad * (in_dim * hid + 3 * hid * hid + hid * out_dim)
    transcendentals = b_pad * out_dim if add_sigmoid else 0
    bytes_accessed = (in_dim * b_pad * x_item             # streamed x
                      + out_dim * b_pad * o_item          # streamed output
                      + (in_dim * hid + hid * hid + hid * out_dim) * x_item
                      + (2 * hid + out_dim) * 4)          # resident params
    cost = pl.CostEstimate(flops=flops, transcendentals=transcendentals,
                           bytes_accessed=bytes_accessed)

    out_t = pl.pallas_call(
        kernel,
        out_shape=jax.ShapeDtypeStruct((out_dim, b_pad), out_dtype),
        grid_spec=pltpu.PrefetchScalarGridSpec(
            num_scalar_prefetch=0,
            grid=(grid_n,),
            in_specs=[
                pl.BlockSpec((in_dim, batch_tile), lambda i: (0, i)),  # x tile
                const_spec((hid, in_dim)),    # w1
                const_spec((hid, 1)),         # b1
                const_spec((hid, hid)),       # w2
                const_spec((hid, 1)),         # b2
                const_spec((out_dim, hid)),   # w3
                const_spec((out_dim, 1)),     # b3
            ],
            out_specs=pl.BlockSpec((out_dim, batch_tile), lambda i: (0, i)),
        ),
        compiler_params=pltpu.CompilerParams(
            dimension_semantics=("parallel",),
            # Raise scoped VMEM above v5e's 16 MiB default so the 16K tile
            # fits on every generation (usage ~10 MiB; all chips have >=64 MiB
            # physical VMEM per TensorCore).
            vmem_limit_bytes=32 * 1024 * 1024,
        ),
        cost_estimate=cost,
    )(x_t, w1, b1, w2, b2, w3, b3)

    # Back to the PyTorch-facing (B, out) shape (cheap: out_dim rows).
    # NOTE: padded batch columns carry garbage until this slice.
    return out_t[:, :B].T


def init_params(key, in_neuron, hidden_neuron, out_neuron):
    """Deterministic synthetic parameters in native torch (out, in) layout."""
    ks = jax.random.split(key, 6)

    def uinit(k, fan_in, shape):
        bound = 1.0 / math.sqrt(fan_in)
        return jax.random.uniform(k, shape, jnp.float32, -bound, bound)

    return {
        "w1": uinit(ks[0], in_neuron, (hidden_neuron, in_neuron)),
        "b1": uinit(ks[1], in_neuron, (hidden_neuron, 1)),
        "w2": uinit(ks[2], hidden_neuron, (hidden_neuron, hidden_neuron)),
        "b2": uinit(ks[3], hidden_neuron, (hidden_neuron, 1)),
        "w3": uinit(ks[4], hidden_neuron, (out_neuron, hidden_neuron)),
        "b3": uinit(ks[5], hidden_neuron, (out_neuron, 1)),
    }


def ann_reference(x, params, *, add_sigmoid: bool):
    """Plain-JAX reference mirroring the torch forward pass."""
    h = _leaky_relu(x @ params["w1"].T + params["b1"].T)
    for _ in range(3):
        h = _leaky_relu(h @ params["w2"].T + params["b2"].T)
    out = h @ params["w3"].T + params["b3"].T
    if add_sigmoid:
        out = jax.nn.sigmoid(out)
    return out


if __name__ == "__main__":
    in_neuron, hidden_neuron, out_neuron = 16, 32, 4
    add_sigmoid = True  # config.NN_add_sigmoid

    key = jax.random.PRNGKey(0)
    kx, kp, kx2 = jax.random.split(key, 3)
    params = init_params(kp, in_neuron, hidden_neuron, out_neuron)

    # Small batch (single 256-wide lane-dense tile).
    batch = 8
    x = jax.random.normal(kx, (batch, in_neuron), jnp.float32)
    out = jax.block_until_ready(ann_forward(x, params, add_sigmoid=add_sigmoid))
    ref = ann_reference(x, params, add_sigmoid=add_sigmoid)
    assert out.shape == (batch, out_neuron)
    assert jnp.allclose(out, ref, atol=1e-5, rtol=1e-5)

    # Larger batch: even 2-step grid (v7x megacore path), 256-wide tiles.
    batch2 = 512
    x2 = jax.random.normal(kx2, (batch2, in_neuron), jnp.float32)
    ref2 = ann_reference(x2, params, add_sigmoid=add_sigmoid)
    out2 = jax.block_until_ready(
        ann_forward(x2, params, add_sigmoid=add_sigmoid))
    assert out2.shape == (batch2, out_neuron)
    assert jnp.allclose(out2, ref2, atol=1e-5, rtol=1e-5)

    # Pre-transposed fast path: caller already holds x as (in_features, B),
    # so the wrapper performs no transpose/pad pass at all.
    out2_t = jax.block_until_ready(
        ann_forward(x2.T, params, add_sigmoid=add_sigmoid, x_transposed=True))
    assert jnp.allclose(out2_t, ref2, atol=1e-5, rtol=1e-5)

    # bf16 streaming variant: halves streamed-x HBM bytes (cast fused into the
    # transpose pass), f32 accumulation; looser tolerance vs the f32 reference.
    out2_bf16 = jax.block_until_ready(
        ann_forward(x2, params, add_sigmoid=add_sigmoid,
                    compute_dtype=jnp.bfloat16))
    assert jnp.allclose(out2_bf16, ref2, atol=5e-2, rtol=5e-2)

    print("KERNEL_OK")
</pallas_src>

<mosaic_0001>
module attributes {stable_mosaic.version = 11 : i64} {
  func.func @_ann_kernel(%arg0: i32, %arg1: memref<16x256xf32, #tpu.memory_space<vmem>>, %arg2: memref<32x16xf32, #tpu.memory_space<vmem>>, %arg3: memref<32x1xf32, #tpu.memory_space<vmem>>, %arg4: memref<32x32xf32, #tpu.memory_space<vmem>>, %arg5: memref<32x1xf32, #tpu.memory_space<vmem>>, %arg6: memref<4x32xf32, #tpu.memory_space<vmem>>, %arg7: memref<4x1xf32, #tpu.memory_space<vmem>>, %arg8: memref<4x256xf32, #tpu.memory_space<vmem>>) attributes {dimension_semantics = [#tpu.dimension_semantics<parallel>], iteration_bounds = array<i64: 1>, scalar_prefetch = 0 : i64, scratch_operands = 0 : i64, tpu.core_type = #tpu.core_type<tc>, window_params = [{transform_indices = @transform_0, window_bounds = array<i64: 16, 256>}, {pipeline_mode = #tpu.pipeline_mode<synchronous>, transform_indices = @transform_1, window_bounds = array<i64: 32, 16>}, {pipeline_mode = #tpu.pipeline_mode<synchronous>, transform_indices = @transform_2, window_bounds = array<i64: 32, 1>}, {pipeline_mode = #tpu.pipeline_mode<synchronous>, transform_indices = @transform_3, window_bounds = array<i64: 32, 32>}, {pipeline_mode = #tpu.pipeline_mode<synchronous>, transform_indices = @transform_4, window_bounds = array<i64: 32, 1>}, {pipeline_mode = #tpu.pipeline_mode<synchronous>, transform_indices = @transform_5, window_bounds = array<i64: 4, 32>}, {pipeline_mode = #tpu.pipeline_mode<synchronous>, transform_indices = @transform_6, window_bounds = array<i64: 4, 1>}, {transform_indices = @transform_7, window_bounds = array<i64: 4, 256>}]} {
    %c0 = arith.constant 0 : index
    %c0_0 = arith.constant 0 : index
    %0 = vector.load %arg1[%c0, %c0_0] : memref<16x256xf32, #tpu.memory_space<vmem>>, vector<16x256xf32>
    %c0_1 = arith.constant 0 : index
    %c0_2 = arith.constant 0 : index
    %1 = vector.load %arg2[%c0_1, %c0_2] : memref<32x16xf32, #tpu.memory_space<vmem>>, vector<32x16xf32>
    %c0_3 = arith.constant 0 : index
    %c0_4 = arith.constant 0 : index
    %2 = vector.load %arg4[%c0_3, %c0_4] : memref<32x32xf32, #tpu.memory_space<vmem>>, vector<32x32xf32>
    %c0_5 = arith.constant 0 : index
    %c0_6 = arith.constant 0 : index
    %3 = vector.load %arg6[%c0_5, %c0_6] : memref<4x32xf32, #tpu.memory_space<vmem>>, vector<4x32xf32>
    %c0_7 = arith.constant 0 : index
    %c0_8 = arith.constant 0 : index
    %4 = vector.load %arg3[%c0_7, %c0_8] : memref<32x1xf32, #tpu.memory_space<vmem>>, vector<32x1xf32>
    %c0_9 = arith.constant 0 : index
    %c0_10 = arith.constant 0 : index
    %5 = vector.load %arg5[%c0_9, %c0_10] : memref<32x1xf32, #tpu.memory_space<vmem>>, vector<32x1xf32>
    %c0_11 = arith.constant 0 : index
    %c0_12 = arith.constant 0 : index
    %6 = vector.load %arg7[%c0_11, %c0_12] : memref<4x1xf32, #tpu.memory_space<vmem>>, vector<4x1xf32>
    %cst = arith.constant dense<0.000000e+00> : vector<32x256xf32>
    %7 = tpu.matmul %1, %0, %cst {dimension_numbers = #tpu.dot_dimension_numbers<[1], [0], [0], [1], [0, 0, 1, 1], [], []>} : vector<32x16xf32>, vector<16x256xf32>, vector<32x256xf32> -> vector<32x256xf32>
    %8 = vector.broadcast %4 : vector<32x1xf32> to vector<32x256xf32>
    %9 = arith.addf %7, %8 : vector<32x256xf32>
    %cst_13 = arith.constant 0.000000e+00 : f32
    %10 = vector.broadcast %cst_13 : f32 to vector<32x256xf32>
    %11 = arith.cmpf oge, %9, %10 : vector<32x256xf32>
    %cst_14 = arith.constant 0.00999999977 : f32
    %12 = vector.broadcast %cst_14 : f32 to vector<32x256xf32>
    %13 = arith.mulf %12, %9 : vector<32x256xf32>
    %14 = arith.select %11, %9, %13 : vector<32x256xi1>, vector<32x256xf32>
    %cst_15 = arith.constant dense<0.000000e+00> : vector<32x256xf32>
    %15 = tpu.matmul %2, %14, %cst_15 {dimension_numbers = #tpu.dot_dimension_numbers<[1], [0], [0], [1], [0, 0, 1, 1], [], []>} : vector<32x32xf32>, vector<32x256xf32>, vector<32x256xf32> -> vector<32x256xf32>
    %16 = vector.broadcast %5 : vector<32x1xf32> to vector<32x256xf32>
    %17 = arith.addf %15, %16 : vector<32x256xf32>
    %cst_16 = arith.constant 0.000000e+00 : f32
    %18 = vector.broadcast %cst_16 : f32 to vector<32x256xf32>
    %19 = arith.cmpf oge, %17, %18 : vector<32x256xf32>
    %cst_17 = arith.constant 0.00999999977 : f32
    %20 = vector.broadcast %cst_17 : f32 to vector<32x256xf32>
    %21 = arith.mulf %20, %17 : vector<32x256xf32>
    %22 = arith.select %19, %17, %21 : vector<32x256xi1>, vector<32x256xf32>
    %cst_18 = arith.constant dense<0.000000e+00> : vector<32x256xf32>
    %23 = tpu.matmul %2, %22, %cst_18 {dimension_numbers = #tpu.dot_dimension_numbers<[1], [0], [0], [1], [0, 0, 1, 1], [], []>} : vector<32x32xf32>, vector<32x256xf32>, vector<32x256xf32> -> vector<32x256xf32>
    %24 = vector.broadcast %5 : vector<32x1xf32> to vector<32x256xf32>
    %25 = arith.addf %23, %24 : vector<32x256xf32>
    %cst_19 = arith.constant 0.000000e+00 : f32
    %26 = vector.broadcast %cst_19 : f32 to vector<32x256xf32>
    %27 = arith.cmpf oge, %25, %26 : vector<32x256xf32>
    %cst_20 = arith.constant 0.00999999977 : f32
    %28 = vector.broadcast %cst_20 : f32 to vector<32x256xf32>
    %29 = arith.mulf %28, %25 : vector<32x256xf32>
    %30 = arith.select %27, %25, %29 : vector<32x256xi1>, vector<32x256xf32>
    %cst_21 = arith.constant dense<0.000000e+00> : vector<32x256xf32>
    %31 = tpu.matmul %2, %30, %cst_21 {dimension_numbers = #tpu.dot_dimension_numbers<[1], [0], [0], [1], [0, 0, 1, 1], [], []>} : vector<32x32xf32>, vector<32x256xf32>, vector<32x256xf32> -> vector<32x256xf32>
    %32 = vector.broadcast %5 : vector<32x1xf32> to vector<32x256xf32>
    %33 = arith.addf %31, %32 : vector<32x256xf32>
    %cst_22 = arith.constant 0.000000e+00 : f32
    %34 = vector.broadcast %cst_22 : f32 to vector<32x256xf32>
    %35 = arith.cmpf oge, %33, %34 : vector<32x256xf32>
    %cst_23 = arith.constant 0.00999999977 : f32
    %36 = vector.broadcast %cst_23 : f32 to vector<32x256xf32>
    %37 = arith.mulf %36, %33 : vector<32x256xf32>
    %38 = arith.select %35, %33, %37 : vector<32x256xi1>, vector<32x256xf32>
    %cst_24 = arith.constant dense<0.000000e+00> : vector<4x256xf32>
    %39 = tpu.matmul %3, %38, %cst_24 {dimension_numbers = #tpu.dot_dimension_numbers<[1], [0], [0], [1], [0, 0, 1, 1], [], []>} : vector<4x32xf32>, vector<32x256xf32>, vector<4x256xf32> -> vector<4x256xf32>
    %40 = vector.broadcast %6 : vector<4x1xf32> to vector<4x256xf32>
    %41 = arith.addf %39, %40 : vector<4x256xf32>
    %42 = arith.negf %41 : vector<4x256xf32>
    %43 = math.exp %42 : vector<4x256xf32>
    %cst_25 = arith.constant 1.000000e+00 : f32
    %44 = vector.broadcast %cst_25 : f32 to vector<4x256xf32>
    %45 = arith.addf %44, %43 : vector<4x256xf32>
    %46 = arith.divf %44, %45 : vector<4x256xf32>
    %c0_26 = arith.constant 0 : index
    %c0_27 = arith.constant 0 : index
    %47 = vector.load %arg8[%c0_26, %c0_27] : memref<4x256xf32, #tpu.memory_space<vmem>>, vector<4x256xf32>
    tpu.vector_store %arg8[%c0_26, %c0_27], %46 {strides = array<i32>} : memref<4x256xf32, #tpu.memory_space<vmem>>, vector<4x256xf32>,
    return
  }
  func.func @transform_0(%arg0: i32) -> (i32, i32) {
    %c0_i32 = arith.constant 0 : i32
    %c0_i32_0 = arith.constant 0 : i32
    return %c0_i32, %arg0 : i32, i32
  }
  func.func @transform_1(%arg0: i32) -> (i32, i32) {
    %c0_i32 = arith.constant 0 : i32
    %c0_i32_0 = arith.constant 0 : i32
    %c0_i32_1 = arith.constant 0 : i32
    return %c0_i32, %c0_i32_0 : i32, i32
  }
  func.func @transform_2(%arg0: i32) -> (i32, i32) {
    %c0_i32 = arith.constant 0 : i32
    %c0_i32_0 = arith.constant 0 : i32
    %c0_i32_1 = arith.constant 0 : i32
    return %c0_i32, %c0_i32_0 : i32, i32
  }
  func.func @transform_3(%arg0: i32) -> (i32, i32) {
    %c0_i32 = arith.constant 0 : i32
    %c0_i32_0 = arith.constant 0 : i32
    %c0_i32_1 = arith.constant 0 : i32
    return %c0_i32, %c0_i32_0 : i32, i32
  }
  func.func @transform_4(%arg0: i32) -> (i32, i32) {
    %c0_i32 = arith.constant 0 : i32
    %c0_i32_0 = arith.constant 0 : i32
    %c0_i32_1 = arith.constant 0 : i32
    return %c0_i32, %c0_i32_0 : i32, i32
  }
  func.func @transform_5(%arg0: i32) -> (i32, i32) {
    %c0_i32 = arith.constant 0 : i32
    %c0_i32_0 = arith.constant 0 : i32
    %c0_i32_1 = arith.constant 0 : i32
    return %c0_i32, %c0_i32_0 : i32, i32
  }
  func.func @transform_6(%arg0: i32) -> (i32, i32) {
    %c0_i32 = arith.constant 0 : i32
    %c0_i32_0 = arith.constant 0 : i32
    %c0_i32_1 = arith.constant 0 : i32
    return %c0_i32, %c0_i32_0 : i32, i32
  }
  func.func @transform_7(%arg0: i32) -> (i32, i32) {
    %c0_i32 = arith.constant 0 : i32
    %c0_i32_0 = arith.constant 0 : i32
    return %c0_i32, %arg0 : i32, i32
  }
}

</mosaic_0001>

<llo_original>
// kernel: ann_forward.1
$region0: #{ann_forward.1}
  #allocation0 [shape = 'u32[]', space=smem, size = 0x4, offset = 0x4, fixed_abs, tag = 'smem constant byte address 0x4 - core index']
  #allocation1 [shape = 'u32[144,128]{1,0:T(1,128)}', space=vmem, size = 0x12000, scoped, tag = 'internal scratch']
  %s0 = inlined_call_operand.vmem [shape: f32[16,256], index: 0, kind: input, shape index: {}]
  %s1 = inlined_call_operand.vmem [shape: f32[32,16], index: 1, kind: input, shape index: {}]
  %s2 = inlined_call_operand.vmem [shape: f32[32,1], index: 2, kind: input, shape index: {}]
  %s3 = inlined_call_operand.vmem [shape: f32[32,32], index: 3, kind: input, shape index: {}]
  %s4 = inlined_call_operand.vmem [shape: f32[32,1], index: 4, kind: input, shape index: {}]
  %s5 = inlined_call_operand.vmem [shape: f32[4,32], index: 5, kind: input, shape index: {}]
  %s6 = inlined_call_operand.vmem [shape: f32[4,1], index: 6, kind: input, shape index: {}]
  %s7 = inlined_call_operand.vmem [shape: f32[4,256], index: 7, kind: output, shape index: {}]
  %s8 = sld [smem:[#allocation0]]
  $region38: #{ann_forward.1} parent=0
    _
  %s10 = ssub.s32 1, %s8
  %s11 = scalar_select 0, %s10, %s8
  // Predicated region
  $region2: #{ann_forward.1} parent=0 // pred_check
    _
  $region3: #{ann_forward.1} parent=0 // pred_check_branch
    %13 = sbr.rel (0) target = $region5
  $region4: #{ann_forward.1} parent=0 // pred_region
    _
  $region5: #{ann_forward.1} parent=0 // pred_fallthru
    _
  // Predicated region
  $region6: #{ann_forward.1} parent=0 // pred_check
    _
  $region7: #{ann_forward.1} parent=0 // pred_check_branch
    %15 = sbr.rel (0) target = $region9
  $region8: #{ann_forward.1} parent=0 // pred_region
    _
  $region9: #{ann_forward.1} parent=0 // pred_fallthru
    _
  // Predicated region
  $region10: #{ann_forward.1} parent=0 // pred_check
    _
  $region11: #{ann_forward.1} parent=0 // pred_check_branch
    %17 = sbr.rel (0) target = $region13
  $region12: #{ann_forward.1} parent=0 // pred_region
    _
  $region13: #{ann_forward.1} parent=0 // pred_fallthru
    _
  // Predicated region
  $region14: #{ann_forward.1} parent=0 // pred_check
    _
  $region15: #{ann_forward.1} parent=0 // pred_check_branch
    %19 = sbr.rel (0) target = $region17
  $region16: #{ann_forward.1} parent=0 // pred_region
    _
  $region17: #{ann_forward.1} parent=0 // pred_fallthru
    _
  // Predicated region
  $region18: #{ann_forward.1} parent=0 // pred_check
    _
  $region19: #{ann_forward.1} parent=0 // pred_check_branch
    %21 = sbr.rel (0) target = $region21
  $region20: #{ann_forward.1} parent=0 // pred_region
    _
  $region21: #{ann_forward.1} parent=0 // pred_fallthru
    _
  // Predicated region
  $region22: #{ann_forward.1} parent=0 // pred_check
    _
  $region23: #{ann_forward.1} parent=0 // pred_check_branch
    %23 = sbr.rel (0) target = $region25
  $region24: #{ann_forward.1} parent=0 // pred_region
    _
  $region25: #{ann_forward.1} parent=0 // pred_fallthru
    _
  // Predicated region
  $region26: #{ann_forward.1} parent=0 // pred_check
    _
  $region27: #{ann_forward.1} parent=0 // pred_check_branch
    %25 = sbr.rel (0) target = $region29
  $region28: #{ann_forward.1} parent=0 // pred_region
    _
  $region29: #{ann_forward.1} parent=0 // pred_fallthru
    _
  %v26 = vld [vmem:[%s0] sm:$0xff]
  %v27 = vld [vmem:[%s0 + $0x8] sm:$0xff]
  %v28 = vld [vmem:[%s0 + $0x10] sm:$0xff]
  %v29 = vld [vmem:[%s0 + $0x18] sm:$0xff]
  %v30 = vld [vmem:[%s1] sm:$0xff]
  %v31 = vld [vmem:[%s1 + $0x8] sm:$0xff]
  %v32 = vld [vmem:[%s1 + $0x10] sm:$0xff]
  %v33 = vld [vmem:[%s1 + $0x18] sm:$0xff]
  %v34 = vld [vmem:[%s3] sm:$0xff]
  %v35 = vld [vmem:[%s3 + $0x8] sm:$0xff]
  %v36 = vld [vmem:[%s3 + $0x10] sm:$0xff]
  %v37 = vld [vmem:[%s3 + $0x18] sm:$0xff]
  %v38 = vld [vmem:[%s5] sm:$0xf]
  %v39 = vld [vmem:[%s2] sm:$0xff]
  %v40 = vld [vmem:[%s2 + $0x8] sm:$0xff]
  %v41 = vld [vmem:[%s2 + $0x10] sm:$0xff]
  %v42 = vld [vmem:[%s2 + $0x18] sm:$0xff]
  %v43 = vld [vmem:[%s4] sm:$0xff]
  %v44 = vld [vmem:[%s4 + $0x8] sm:$0xff]
  %v45 = vld [vmem:[%s4 + $0x10] sm:$0xff]
  %v46 = vld [vmem:[%s4 + $0x18] sm:$0xff]
  %v47 = vld [vmem:[%s6] sm:$0xf]
  %49 = vset.pattern.permute.xlu0 0
  %50 = vperm.xlu0 %49, %v39
  %v51 = vpop.permute.xlu0 %50
  %54 = vset.pattern.permute.xlu0 0
  %55 = vperm.xlu0 %54, %v40
  %v56 = vpop.permute.xlu0 %55
  %59 = vset.pattern.permute.xlu0 0
  %60 = vperm.xlu0 %59, %v41
  %v61 = vpop.permute.xlu0 %60
  %64 = vset.pattern.permute.xlu0 0
  %65 = vperm.xlu0 %64, %v42
  %v66 = vpop.permute.xlu0 %65
  %vm68 = vcmask 130048
  %v70 = vsel %vm68, %v30, 0
  %v73 = vsel %vm68, %v31, 0
  %v76 = vsel %vm68, %v32, 0
  %v79 = vsel %vm68, %v33, 0
  %81 = vmatprep.subr.mxu0 0.0
  %82 = vmatpush1.msra.mxu0 0.0
  %83 = vmatprep.subr.mxu0 0.0
  %84 = vmatpush1.msra.mxu0 0.0
  %85 = vmatprep.subr.mxu0 0.0
  %86 = vmatpush1.msra.mxu0 0.0
  %87 = vmatprep.subr.mxu0 0.0
  %88 = vmatpush1.msra.mxu0 0.0
  %89 = vmatprep.subr.mxu0 0.0
  %90 = vmatpush1.msra.mxu0 0.0
  %91 = vmatprep.subr.mxu0 0.0
  %92 = vmatpush1.msra.mxu0 0.0
  %93 = vmatprep.subr.mxu0 0.0
  %94 = vmatpush1.msra.mxu0 0.0
  %95 = vmatprep.subr.mxu0 0.0
  %96 = vmatpush1.msra.mxu0 0.0
  %97 = vmatprep.subr.mxu0 0.0
  %98 = vmatpush1.msra.mxu0 0.0
  %99 = vmatprep.subr.mxu0 0.0
  %100 = vmatpush1.msra.mxu0 0.0
  %101 = vmatprep.subr.mxu0 0.0
  %102 = vmatpush1.msra.mxu0 0.0
  %103 = vmatprep.subr.mxu0 0.0
  %104 = vmatpush1.msra.mxu0 0.0
  %105 = vmatprep.subr.mxu0 0.0
  %106 = vmatpush1.msra.mxu0 0.0
  %107 = vmatprep.subr.mxu0 0.0
  %108 = vmatpush1.msra.mxu0 0.0
  %109 = vmatprep.subr.mxu0 %v29
  %110 = vmatpush1.msra.mxu0 %v28
  %111 = vmatprep.subr.mxu0 %v27
  %112 = vmatpush1.msra.mxu0 %v26
  %113 = vmatprep.subr.mxu0 0.0
  %114 = vmatpush2.msra.mxu0 0.0
  %115 = vmatprep.subr.mxu0 0.0
  %116 = vmatpush2.msra.mxu0 0.0
  %117 = vmatprep.subr.mxu0 0.0
  %118 = vmatpush2.msra.mxu0 0.0
  %119 = vmatprep.subr.mxu0 0.0
  %120 = vmatpush2.msra.mxu0 0.0
  %121 = vmatprep.subr.mxu0 0.0
  %122 = vmatpush2.msra.mxu0 0.0
  %123 = vmatprep.subr.mxu0 0.0
  %124 = vmatpush2.msra.mxu0 0.0
  %125 = vmatprep.subr.mxu0 0.0
  %126 = vmatpush2.msra.mxu0 0.0
  %127 = vmatprep.subr.mxu0 0.0
  %128 = vmatpush2.msra.mxu0 0.0
  %129 = vmatprep.subr.mxu0 0.0
  %130 = vmatpush2.msra.mxu0 0.0
  %131 = vmatprep.subr.mxu0 0.0
  %132 = vmatpush2.msra.mxu0 0.0
  %133 = vmatprep.subr.mxu0 0.0
  %134 = vmatpush2.msra.mxu0 0.0
  %135 = vmatprep.subr.mxu0 0.0
  %136 = vmatpush2.msra.mxu0 0.0
  %137 = vmatprep.subr.mxu0 0.0
  %138 = vmatpush2.msra.mxu0 0.0
  %139 = vmatprep.subr.mxu0 0.0
  %140 = vmatpush2.msra.mxu0 0.0
  %141 = vmatprep.subr.mxu0 0.0
  %142 = vmatpush2.msra.mxu0 0.0
  %143 = vmatprep.subr.mxu0 0.0
  %144 = vmatpush2.msra.mxu0 0.0
  %145 = vmatprep.mubr.f32.mxu0 0.0
  %146 = vmatmul.mubr.f32.gmra.mxu0 %v70
  %v147 = vpop.f32.mrf.mxu0
  %v148 = vadd.f32 %v51, %v147
  %v149 = vpop.f32.mrf.mxu0
  %v150 = vadd.f32 %v51, %v149
  %151 = vmatprep.mubr.f32.mxu0 0.0
  %152 = vmatmul.mubr.f32.gmra.mxu0 %v73
  %v153 = vpop.f32.mrf.mxu0
  %v154 = vadd.f32 %v56, %v153
  %v155 = vpop.f32.mrf.mxu0
  %v156 = vadd.f32 %v56, %v155
  %157 = vmatprep.mubr.f32.mxu0 0.0
  %158 = vmatmul.mubr.f32.gmra.mxu0 %v76
  %v159 = vpop.f32.mrf.mxu0
  %v160 = vadd.f32 %v61, %v159
  %v161 = vpop.f32.mrf.mxu0
  %v162 = vadd.f32 %v61, %v161
  %163 = vmatprep.mubr.f32.mxu0 0.0
  %164 = vmatmul.mubr.f32.gmra.mxu0 %v79
  %v165 = vpop.f32.mrf.mxu0
  %v166 = vadd.f32 %v66, %v165
  %v167 = vpop.f32.mrf.mxu0
  %v168 = vadd.f32 %v66, %v167
  %169 = vdwg.mxu0
  %vm170 = vcmp.ge.f32.partialorder %v148, 0.0
  %vm171 = vcmp.ge.f32.partialorder %v150, 0.0
  %vm172 = vcmp.ge.f32.partialorder %v154, 0.0
  %vm173 = vcmp.ge.f32.partialorder %v156, 0.0
  %vm174 = vcmp.ge.f32.partialorder %v160, 0.0
  %vm175 = vcmp.ge.f32.partialorder %v162, 0.0
  %vm176 = vcmp.ge.f32.partialorder %v166, 0.0
  %vm177 = vcmp.ge.f32.partialorder %v168, 0.0
  %v178 = vmul.f32 %v148, 0.01
  %v179 = vmul.f32 %v150, 0.01
  %v180 = vmul.f32 %v154, 0.01
  %v181 = vmul.f32 %v156, 0.01
  %v182 = vmul.f32 %v160, 0.01
  %v183 = vmul.f32 %v162, 0.01
  %v184 = vmul.f32 %v166, 0.01
  %v185 = vmul.f32 %v168, 0.01
  %v186 = vsel %vm170, %v148, %v178
  %v187 = vsel %vm171, %v150, %v179
  %v188 = vsel %vm172, %v154, %v180
  %v189 = vsel %vm173, %v156, %v181
  %v190 = vsel %vm174, %v160, %v182
  %v191 = vsel %vm175, %v162, %v183
  %v192 = vsel %vm176, %v166, %v184
  %v193 = vsel %vm177, %v168, %v185
  %195 = vset.pattern.permute.xlu0 0
  %196 = vperm.xlu0 %195, %v43
  %v197 = vpop.permute.xlu0 %196
  %200 = vset.pattern.permute.xlu0 0
  %201 = vperm.xlu0 %200, %v44
  %v202 = vpop.permute.xlu0 %201
  %205 = vset.pattern.permute.xlu0 0
  %206 = vperm.xlu0 %205, %v45
  %v207 = vpop.permute.xlu0 %206
  %210 = vset.pattern.permute.xlu0 0
  %211 = vperm.xlu0 %210, %v46
  %v212 = vpop.permute.xlu0 %211
  %vm214 = vcmask 261120
  %v216 = vsel %vm214, %v34, 0
  %v219 = vsel %vm214, %v35, 0
  %v222 = vsel %vm214, %v36, 0
  %v225 = vsel %vm214, %v37, 0
  %227 = vmatprep.subr.mxu0 0.0
  %228 = vmatpush1.msra.mxu0 0.0
  %229 = vmatprep.subr.mxu0 0.0
  %230 = vmatpush1.msra.mxu0 0.0
  %231 = vmatprep.subr.mxu0 0.0
  %232 = vmatpush1.msra.mxu0 0.0
  %233 = vmatprep.subr.mxu0 0.0
  %234 = vmatpush1.msra.mxu0 0.0
  %235 = vmatprep.subr.mxu0 0.0
  %236 = vmatpush1.msra.mxu0 0.0
  %237 = vmatprep.subr.mxu0 0.0
  %238 = vmatpush1.msra.mxu0 0.0
  %239 = vmatprep.subr.mxu0 0.0
  %240 = vmatpush1.msra.mxu0 0.0
  %241 = vmatprep.subr.mxu0 0.0
  %242 = vmatpush1.msra.mxu0 0.0
  %243 = vmatprep.subr.mxu0 0.0
  %244 = vmatpush1.msra.mxu0 0.0
  %245 = vmatprep.subr.mxu0 0.0
  %246 = vmatpush1.msra.mxu0 0.0
  %247 = vmatprep.subr.mxu0 0.0
  %248 = vmatpush1.msra.mxu0 0.0
  %249 = vmatprep.subr.mxu0 0.0
  %250 = vmatpush1.msra.mxu0 0.0
  %251 = vmatprep.subr.mxu0 %v193
  %252 = vmatpush1.msra.mxu0 %v192
  %253 = vmatprep.subr.mxu0 %v191
  %254 = vmatpush1.msra.mxu0 %v190
  %255 = vmatprep.subr.mxu0 %v189
  %256 = vmatpush1.msra.mxu0 %v188
  %257 = vmatprep.subr.mxu0 %v187
  %258 = vmatpush1.msra.mxu0 %v186
  %259 = vmatprep.subr.mxu0 0.0
  %260 = vmatpush2.msra.mxu0 0.0
  %261 = vmatprep.subr.mxu0 0.0
  %262 = vmatpush2.msra.mxu0 0.0
  %263 = vmatprep.subr.mxu0 0.0
  %264 = vmatpush2.msra.mxu0 0.0
  %265 = vmatprep.subr.mxu0 0.0
  %266 = vmatpush2.msra.mxu0 0.0
  %267 = vmatprep.subr.mxu0 0.0
  %268 = vmatpush2.msra.mxu0 0.0
  %269 = vmatprep.subr.mxu0 0.0
  %270 = vmatpush2.msra.mxu0 0.0
  %271 = vmatprep.subr.mxu0 0.0
  %272 = vmatpush2.msra.mxu0 0.0
  %273 = vmatprep.subr.mxu0 0.0
  %274 = vmatpush2.msra.mxu0 0.0
  %275 = vmatprep.subr.mxu0 0.0
  %276 = vmatpush2.msra.mxu0 0.0
  %277 = vmatprep.subr.mxu0 0.0
  %278 = vmatpush2.msra.mxu0 0.0
  %279 = vmatprep.subr.mxu0 0.0
  %280 = vmatpush2.msra.mxu0 0.0
  %281 = vmatprep.subr.mxu0 0.0
  %282 = vmatpush2.msra.mxu0 0.0
  %283 = vmatprep.subr.mxu0 0.0
  %284 = vmatpush2.msra.mxu0 0.0
  %285 = vmatprep.subr.mxu0 0.0
  %286 = vmatpush2.msra.mxu0 0.0
  %287 = vmatprep.subr.mxu0 0.0
  %288 = vmatpush2.msra.mxu0 0.0
  %289 = vmatprep.subr.mxu0 0.0
  %290 = vmatpush2.msra.mxu0 0.0
  %291 = vmatprep.mubr.f32.mxu0 0.0
  %292 = vmatmul.mubr.f32.gmra.mxu0 %v216
  %v293 = vpop.f32.mrf.mxu0
  %v294 = vadd.f32 %v197, %v293
  %v295 = vpop.f32.mrf.mxu0
  %v296 = vadd.f32 %v197, %v295
  %297 = vmatprep.mubr.f32.mxu0 0.0
  %298 = vmatmul.mubr.f32.gmra.mxu0 %v219
  %v299 = vpop.f32.mrf.mxu0
  %v300 = vadd.f32 %v202, %v299
  %v301 = vpop.f32.mrf.mxu0
  %v302 = vadd.f32 %v202, %v301
  %303 = vmatprep.mubr.f32.mxu0 0.0
  %304 = vmatmul.mubr.f32.gmra.mxu0 %v222
  %v305 = vpop.f32.mrf.mxu0
  %v306 = vadd.f32 %v207, %v305
  %v307 = vpop.f32.mrf.mxu0
  %v308 = vadd.f32 %v207, %v307
  %309 = vmatprep.mubr.f32.mxu0 0.0
  %310 = vmatmul.mubr.f32.gmra.mxu0 %v225
  %v311 = vpop.f32.mrf.mxu0
  %v312 = vadd.f32 %v212, %v311
  %v313 = vpop.f32.mrf.mxu0
  %v314 = vadd.f32 %v212, %v313
  %315 = vdwg.mxu0
  %vm316 = vcmp.ge.f32.partialorder %v294, 0.0
  %vm317 = vcmp.ge.f32.partialorder %v296, 0.0
  %vm318 = vcmp.ge.f32.partialorder %v300, 0.0
  %vm319 = vcmp.ge.f32.partialorder %v302, 0.0
  %vm320 = vcmp.ge.f32.partialorder %v306, 0.0
  %vm321 = vcmp.ge.f32.partialorder %v308, 0.0
  %vm322 = vcmp.ge.f32.partialorder %v312, 0.0
  %vm323 = vcmp.ge.f32.partialorder %v314, 0.0
  %v324 = vmul.f32 %v294, 0.01
  %v325 = vmul.f32 %v296, 0.01
  %v326 = vmul.f32 %v300, 0.01
  %v327 = vmul.f32 %v302, 0.01
  %v328 = vmul.f32 %v306, 0.01
  %v329 = vmul.f32 %v308, 0.01
  %v330 = vmul.f32 %v312, 0.01
  %v331 = vmul.f32 %v314, 0.01
  %v332 = vsel %vm316, %v294, %v324
  %v333 = vsel %vm317, %v296, %v325
  %v334 = vsel %vm318, %v300, %v326
  %v335 = vsel %vm319, %v302, %v327
  %v336 = vsel %vm320, %v306, %v328
  %v337 = vsel %vm321, %v308, %v329
  %v338 = vsel %vm322, %v312, %v330
  %v339 = vsel %vm323, %v314, %v331
  %340 = vmatprep.subr.mxu0 0.0
  %341 = vmatpush1.msra.mxu0 0.0
  %342 = vmatprep.subr.mxu0 0.0
  %343 = vmatpush1.msra.mxu0 0.0
  %344 = vmatprep.subr.mxu0 0.0
  %345 = vmatpush1.msra.mxu0 0.0
  %346 = vmatprep.subr.mxu0 0.0
  %347 = vmatpush1.msra.mxu0 0.0
  %348 = vmatprep.subr.mxu0 0.0
  %349 = vmatpush1.msra.mxu0 0.0
  %350 = vmatprep.subr.mxu0 0.0
  %351 = vmatpush1.msra.mxu0 0.0
  %352 = vmatprep.subr.mxu0 0.0
  %353 = vmatpush1.msra.mxu0 0.0
  %354 = vmatprep.subr.mxu0 0.0
  %355 = vmatpush1.msra.mxu0 0.0
  %356 = vmatprep.subr.mxu0 0.0
  %357 = vmatpush1.msra.mxu0 0.0
  %358 = vmatprep.subr.mxu0 0.0
  %359 = vmatpush1.msra.mxu0 0.0
  %360 = vmatprep.subr.mxu0 0.0
  %361 = vmatpush1.msra.mxu0 0.0
  %362 = vmatprep.subr.mxu0 0.0
  %363 = vmatpush1.msra.mxu0 0.0
  %364 = vmatprep.subr.mxu0 %v339
  %365 = vmatpush1.msra.mxu0 %v338
  %366 = vmatprep.subr.mxu0 %v337
  %367 = vmatpush1.msra.mxu0 %v336
  %368 = vmatprep.subr.mxu0 %v335
  %369 = vmatpush1.msra.mxu0 %v334
  %370 = vmatprep.subr.mxu0 %v333
  %371 = vmatpush1.msra.mxu0 %v332
  %372 = vmatprep.subr.mxu0 0.0
  %373 = vmatpush2.msra.mxu0 0.0
  %374 = vmatprep.subr.mxu0 0.0
  %375 = vmatpush2.msra.mxu0 0.0
  %376 = vmatprep.subr.mxu0 0.0
  %377 = vmatpush2.msra.mxu0 0.0
  %378 = vmatprep.subr.mxu0 0.0
  %379 = vmatpush2.msra.mxu0 0.0
  %380 = vmatprep.subr.mxu0 0.0
  %381 = vmatpush2.msra.mxu0 0.0
  %382 = vmatprep.subr.mxu0 0.0
  %383 = vmatpush2.msra.mxu0 0.0
  %384 = vmatprep.subr.mxu0 0.0
  %385 = vmatpush2.msra.mxu0 0.0
  %386 = vmatprep.subr.mxu0 0.0
  %387 = vmatpush2.msra.mxu0 0.0
  %388 = vmatprep.subr.mxu0 0.0
  %389 = vmatpush2.msra.mxu0 0.0
  %390 = vmatprep.subr.mxu0 0.0
  %391 = vmatpush2.msra.mxu0 0.0
  %392 = vmatprep.subr.mxu0 0.0
  %393 = vmatpush2.msra.mxu0 0.0
  %394 = vmatprep.subr.mxu0 0.0
  %395 = vmatpush2.msra.mxu0 0.0
  %396 = vmatprep.subr.mxu0 0.0
  %397 = vmatpush2.msra.mxu0 0.0
  %398 = vmatprep.subr.mxu0 0.0
  %399 = vmatpush2.msra.mxu0 0.0
  %400 = vmatprep.subr.mxu0 0.0
  %401 = vmatpush2.msra.mxu0 0.0
  %402 = vmatprep.subr.mxu0 0.0
  %403 = vmatpush2.msra.mxu0 0.0
  %404 = vmatprep.mubr.f32.mxu0 0.0
  %405 = vmatmul.mubr.f32.gmra.mxu0 %v216
  %v406 = vpop.f32.mrf.mxu0
  %v407 = vadd.f32 %v197, %v406
  %v408 = vpop.f32.mrf.mxu0
  %v409 = vadd.f32 %v197, %v408
  %410 = vmatprep.mubr.f32.mxu0 0.0
  %411 = vmatmul.mubr.f32.gmra.mxu0 %v219
  %v412 = vpop.f32.mrf.mxu0
  %v413 = vadd.f32 %v202, %v412
  %v414 = vpop.f32.mrf.mxu0
  %v415 = vadd.f32 %v202, %v414
  %416 = vmatprep.mubr.f32.mxu0 0.0
  %417 = vmatmul.mubr.f32.gmra.mxu0 %v222
  %v418 = vpop.f32.mrf.mxu0
  %v419 = vadd.f32 %v207, %v418
  %v420 = vpop.f32.mrf.mxu0
  %v421 = vadd.f32 %v207, %v420
  %422 = vmatprep.mubr.f32.mxu0 0.0
  %423 = vmatmul.mubr.f32.gmra.mxu0 %v225
  %v424 = vpop.f32.mrf.mxu0
  %v425 = vadd.f32 %v212, %v424
  %v426 = vpop.f32.mrf.mxu0
  %v427 = vadd.f32 %v212, %v426
  %428 = vdwg.mxu0
  %vm429 = vcmp.ge.f32.partialorder %v407, 0.0
  %vm430 = vcmp.ge.f32.partialorder %v409, 0.0
  %vm431 = vcmp.ge.f32.partialorder %v413, 0.0
  %vm432 = vcmp.ge.f32.partialorder %v415, 0.0
  %vm433 = vcmp.ge.f32.partialorder %v419, 0.0
  %vm434 = vcmp.ge.f32.partialorder %v421, 0.0
  %vm435 = vcmp.ge.f32.partialorder %v425, 0.0
  %vm436 = vcmp.ge.f32.partialorder %v427, 0.0
  %v437 = vmul.f32 %v407, 0.01
  %v438 = vmul.f32 %v409, 0.01
  %v439 = vmul.f32 %v413, 0.01
  %v440 = vmul.f32 %v415, 0.01
  %v441 = vmul.f32 %v419, 0.01
  %v442 = vmul.f32 %v421, 0.01
  %v443 = vmul.f32 %v425, 0.01
  %v444 = vmul.f32 %v427, 0.01
  %v445 = vsel %vm429, %v407, %v437
  %v446 = vsel %vm430, %v409, %v438
  %v447 = vsel %vm431, %v413, %v439
  %v448 = vsel %vm432, %v415, %v440
  %v449 = vsel %vm433, %v419, %v441
  %v450 = vsel %vm434, %v421, %v442
  %v451 = vsel %vm435, %v425, %v443
  %v452 = vsel %vm436, %v427, %v444
  %453 = vmatprep.subr.mxu0 0.0
  %454 = vmatpush1.msra.mxu0 0.0
  %455 = vmatprep.subr.mxu0 0.0
  %456 = vmatpush1.msra.mxu0 0.0
  %457 = vmatprep.subr.mxu0 0.0
  %458 = vmatpush1.msra.mxu0 0.0
  %459 = vmatprep.subr.mxu0 0.0
  %460 = vmatpush1.msra.mxu0 0.0
  %461 = vmatprep.subr.mxu0 0.0
  %462 = vmatpush1.msra.mxu0 0.0
  %463 = vmatprep.subr.mxu0 0.0
  %464 = vmatpush1.msra.mxu0 0.0
  %465 = vmatprep.subr.mxu0 0.0
  %466 = vmatpush1.msra.mxu0 0.0
  %467 = vmatprep.subr.mxu0 0.0
  %468 = vmatpush1.msra.mxu0 0.0
  %469 = vmatprep.subr.mxu0 0.0
  %470 = vmatpush1.msra.mxu0 0.0
  %471 = vmatprep.subr.mxu0 0.0
  %472 = vmatpush1.msra.mxu0 0.0
  %473 = vmatprep.subr.mxu0 0.0
  %474 = vmatpush1.msra.mxu0 0.0
  %475 = vmatprep.subr.mxu0 0.0
  %476 = vmatpush1.msra.mxu0 0.0
  %477 = vmatprep.subr.mxu0 %v452
  %478 = vmatpush1.msra.mxu0 %v451
  %479 = vmatprep.subr.mxu0 %v450
  %480 = vmatpush1.msra.mxu0 %v449
  %481 = vmatprep.subr.mxu0 %v448
  %482 = vmatpush1.msra.mxu0 %v447
  %483 = vmatprep.subr.mxu0 %v446
  %484 = vmatpush1.msra.mxu0 %v445
  %485 = vmatprep.subr.mxu0 0.0
  %486 = vmatpush2.msra.mxu0 0.0
  %487 = vmatprep.subr.mxu0 0.0
  %488 = vmatpush2.msra.mxu0 0.0
  %489 = vmatprep.subr.mxu0 0.0
  %490 = vmatpush2.msra.mxu0 0.0
  %491 = vmatprep.subr.mxu0 0.0
  %492 = vmatpush2.msra.mxu0 0.0
  %493 = vmatprep.subr.mxu0 0.0
  %494 = vmatpush2.msra.mxu0 0.0
  %495 = vmatprep.subr.mxu0 0.0
  %496 = vmatpush2.msra.mxu0 0.0
  %497 = vmatprep.subr.mxu0 0.0
  %498 = vmatpush2.msra.mxu0 0.0
  %499 = vmatprep.subr.mxu0 0.0
  %500 = vmatpush2.msra.mxu0 0.0
  %501 = vmatprep.subr.mxu0 0.0
  %502 = vmatpush2.msra.mxu0 0.0
  %503 = vmatprep.subr.mxu0 0.0
  %504 = vmatpush2.msra.mxu0 0.0
  %505 = vmatprep.subr.mxu0 0.0
  %506 = vmatpush2.msra.mxu0 0.0
  %507 = vmatprep.subr.mxu0 0.0
  %508 = vmatpush2.msra.mxu0 0.0
  %509 = vmatprep.subr.mxu0 0.0
  %510 = vmatpush2.msra.mxu0 0.0
  %511 = vmatprep.subr.mxu0 0.0
  %512 = vmatpush2.msra.mxu0 0.0
  %513 = vmatprep.subr.mxu0 0.0
  %514 = vmatpush2.msra.mxu0 0.0
  %515 = vmatprep.subr.mxu0 0.0
  %516 = vmatpush2.msra.mxu0 0.0
  %517 = vmatprep.mubr.f32.mxu0 0.0
  %518 = vmatmul.mubr.f32.gmra.mxu0 %v216
  %v519 = vpop.f32.mrf.mxu0
  %v520 = vadd.f32 %v197, %v519
  %v521 = vpop.f32.mrf.mxu0
  %v522 = vadd.f32 %v197, %v521
  %523 = vmatprep.mubr.f32.mxu0 0.0
  %524 = vmatmul.mubr.f32.gmra.mxu0 %v219
  %v525 = vpop.f32.mrf.mxu0
  %v526 = vadd.f32 %v202, %v525
  %v527 = vpop.f32.mrf.mxu0
  %v528 = vadd.f32 %v202, %v527
  %529 = vmatprep.mubr.f32.mxu0 0.0
  %530 = vmatmul.mubr.f32.gmra.mxu0 %v222
  %v531 = vpop.f32.mrf.mxu0
  %v532 = vadd.f32 %v207, %v531
  %v533 = vpop.f32.mrf.mxu0
  %v534 = vadd.f32 %v207, %v533
  %535 = vmatprep.mubr.f32.mxu0 0.0
  %536 = vmatmul.mubr.f32.gmra.mxu0 %v225
  %v537 = vpop.f32.mrf.mxu0
  %v538 = vadd.f32 %v212, %v537
  %v539 = vpop.f32.mrf.mxu0
  %v540 = vadd.f32 %v212, %v539
  %541 = vdwg.mxu0
  %vm542 = vcmp.ge.f32.partialorder %v520, 0.0
  %vm543 = vcmp.ge.f32.partialorder %v522, 0.0
  %vm544 = vcmp.ge.f32.partialorder %v526, 0.0
  %vm545 = vcmp.ge.f32.partialorder %v528, 0.0
  %vm546 = vcmp.ge.f32.partialorder %v532, 0.0
  %vm547 = vcmp.ge.f32.partialorder %v534, 0.0
  %vm548 = vcmp.ge.f32.partialorder %v538, 0.0
  %vm549 = vcmp.ge.f32.partialorder %v540, 0.0
  %v550 = vmul.f32 %v520, 0.01
  %v551 = vmul.f32 %v522, 0.01
  %v552 = vmul.f32 %v526, 0.01
  %v553 = vmul.f32 %v528, 0.01
  %v554 = vmul.f32 %v532, 0.01
  %v555 = vmul.f32 %v534, 0.01
  %v556 = vmul.f32 %v538, 0.01
  %v557 = vmul.f32 %v540, 0.01
  %v558 = vsel %vm542, %v520, %v550
  %v559 = vsel %vm543, %v522, %v551
  %v560 = vsel %vm544, %v526, %v552
  %v561 = vsel %vm545, %v528, %v553
  %v562 = vsel %vm546, %v532, %v554
  %v563 = vsel %vm547, %v534, %v555
  %v564 = vsel %vm548, %v538, %v556
  %v565 = vsel %vm549, %v540, %v557
  %567 = vset.pattern.permute.xlu0 0
  %568 = vperm.xlu0 %567, %v47
  %v569 = vpop.permute.xlu0 %568
  %v572 = vsel %vm214, %v38, 0
  %574 = vmatprep.subr.mxu0 0.0
  %575 = vmatpush1.msra.mxu0 0.0
  %576 = vmatprep.subr.mxu0 0.0
  %577 = vmatpush1.msra.mxu0 0.0
  %578 = vmatprep.subr.mxu0 0.0
  %579 = vmatpush1.msra.mxu0 0.0
  %580 = vmatprep.subr.mxu0 0.0
  %581 = vmatpush1.msra.mxu0 0.0
  %582 = vmatprep.subr.mxu0 0.0
  %583 = vmatpush1.msra.mxu0 0.0
  %584 = vmatprep.subr.mxu0 0.0
  %585 = vmatpush1.msra.mxu0 0.0
  %586 = vmatprep.subr.mxu0 0.0
  %587 = vmatpush1.msra.mxu0 0.0
  %588 = vmatprep.subr.mxu0 0.0
  %589 = vmatpush1.msra.mxu0 0.0
  %590 = vmatprep.subr.mxu0 0.0
  %591 = vmatpush1.msra.mxu0 0.0
  %592 = vmatprep.subr.mxu0 0.0
  %593 = vmatpush1.msra.mxu0 0.0
  %594 = vmatprep.subr.mxu0 0.0
  %595 = vmatpush1.msra.mxu0 0.0
  %596 = vmatprep.subr.mxu0 0.0
  %597 = vmatpush1.msra.mxu0 0.0
  %598 = vmatprep.subr.mxu0 %v565
  %599 = vmatpush1.msra.mxu0 %v564
  %600 = vmatprep.subr.mxu0 %v563
  %601 = vmatpush1.msra.mxu0 %v562
  %602 = vmatprep.subr.mxu0 %v561
  %603 = vmatpush1.msra.mxu0 %v560
  %604 = vmatprep.subr.mxu0 %v559
  %605 = vmatpush1.msra.mxu0 %v558
  %606 = vmatprep.subr.mxu0 0.0
  %607 = vmatpush2.msra.mxu0 0.0
  %608 = vmatprep.subr.mxu0 0.0
  %609 = vmatpush2.msra.mxu0 0.0
  %610 = vmatprep.subr.mxu0 0.0
  %611 = vmatpush2.msra.mxu0 0.0
  %612 = vmatprep.subr.mxu0 0.0
  %613 = vmatpush2.msra.mxu0 0.0
  %614 = vmatprep.subr.mxu0 0.0
  %615 = vmatpush2.msra.mxu0 0.0
  %616 = vmatprep.subr.mxu0 0.0
  %617 = vmatpush2.msra.mxu0 0.0
  %618 = vmatprep.subr.mxu0 0.0
  %619 = vmatpush2.msra.mxu0 0.0
  %620 = vmatprep.subr.mxu0 0.0
  %621 = vmatpush2.msra.mxu0 0.0
  %622 = vmatprep.subr.mxu0 0.0
  %623 = vmatpush2.msra.mxu0 0.0
  %624 = vmatprep.subr.mxu0 0.0
  %625 = vmatpush2.msra.mxu0 0.0
  %626 = vmatprep.subr.mxu0 0.0
  %627 = vmatpush2.msra.mxu0 0.0
  %628 = vmatprep.subr.mxu0 0.0
  %629 = vmatpush2.msra.mxu0 0.0
  %630 = vmatprep.subr.mxu0 0.0
  %631 = vmatpush2.msra.mxu0 0.0
  %632 = vmatprep.subr.mxu0 0.0
  %633 = vmatpush2.msra.mxu0 0.0
  %634 = vmatprep.subr.mxu0 0.0
  %635 = vmatpush2.msra.mxu0 0.0
  %636 = vmatprep.subr.mxu0 0.0
  %637 = vmatpush2.msra.mxu0 0.0
  %638 = vmatprep.mubr.f32.mxu0 0.0
  %639 = vmatmul.mubr.f32.gmra.mxu0 %v572
  %v640 = vpop.f32.mrf.mxu0
  %v641 = vadd.f32 %v569, %v640
  %v642 = vpop.f32.mrf.mxu0
  %v643 = vadd.f32 %v569, %v642
  %644 = vdwg.mxu0
  %v645 = vxor.u32 %v641, 2147483648
  %v646 = vxor.u32 %v643, 2147483648
  %v647 = vmul.f32 %v645, 1.442695
  %v648 = vpow.pop %v647
  %v649 = vmul.f32 %v646, 1.442695
  %v650 = vpow.pop %v649
  %v651 = vadd.f32 %v648, 1.0
  %v652 = vadd.f32 %v650, 1.0
  %v653 = vrcp.pop %v651
  %v654 = vmul.f32 1.0, %v653
  %v655 = vrcp.pop %v652
  %v656 = vmul.f32 1.0, %v655
  %v659 = vcombine.low %v654, %v656
  %661 = vst [vmem:[%s7] sm:$0xff] %v659
  // Predicated region
  $region30: #{ann_forward.1} parent=0 // pred_check
    _
  $region31: #{ann_forward.1} parent=0 // pred_check_branch
    %663 = sbr.rel (0) target = $region33
  $region32: #{ann_forward.1} parent=0 // pred_region
    _
  $region33: #{ann_forward.1} parent=0 // pred_fallthru
    _
  // Predicated region
  $region34: #{ann_forward.1} parent=0 // pred_check
    _
  $region35: #{ann_forward.1} parent=0 // pred_check_branch
    %665 = sbr.rel (0) target = $region37
  $region36: #{ann_forward.1} parent=0 // pred_region
    _
  $region37: #{ann_forward.1} parent=0 // pred_fallthru
    _

</llo_original>
